<compile_context>
chip_gen: v6e
topology: v6e:2x2x1
jax: 0.10.0
libtpu: 0.0.40
codegen_flags: <defaults>
</compile_context>

<pallas_src>
import functools

import jax
import jax.numpy as jnp
from jax.experimental import pallas as pl
from jax.experimental.pallas import tpu as pltpu


def _combined_loss_kernel(logits_ref, targets_ref, out_ref,
                          inter_acc, union_acc, bce_acc, *, smooth):
    j = pl.program_id(1)  # spatial (reduction) axis -- innermost, "arbitrary"

    @pl.when(j == 0)
    def _():
        inter_acc[...] = jnp.zeros_like(inter_acc)
        union_acc[...] = jnp.zeros_like(union_acc)
        bce_acc[...] = jnp.zeros_like(bce_acc)

    x = logits_ref[...].astype(jnp.float32)   # (TR, TS)
    t = targets_ref[...].astype(jnp.float32)  # (TR, TS)

    # Shared transcendental for sigmoid and the stable BCE log term.
    e = jnp.exp(-jnp.abs(x))                  # exp(-|x|)
    inv = 1.0 / (1.0 + e)
    probs = jnp.where(x >= 0.0, inv, e * inv)  # sigmoid(x)

    # Per-row partial sums over this spatial chunk (keepdims -> (TR, 1)).
    inter_acc[...] += jnp.sum(probs * t, axis=1, keepdims=True)
    union_acc[...] += jnp.sum(probs + t, axis=1, keepdims=True)

    # BCEWithLogits (numerically stable): max(x,0) - x*t + log1p(exp(-|x|)).
    bce_elem = jnp.maximum(x, 0.0) - x * t + jnp.log1p(e)
    bce_acc[...] += jnp.sum(bce_elem, axis=1, keepdims=True)

    # Finalize this row tile only after ALL spatial chunks were accumulated.
    @pl.when(j == pl.num_programs(1) - 1)
    def _():
        dice = (2.0 * inter_acc[...] + smooth) / (union_acc[...] + smooth)
        out_ref[0, 0] = jnp.sum(dice)          # sum of per-row dice coeffs
        out_ref[0, 1] = jnp.sum(bce_acc[...])  # sum of per-element BCE terms


def _largest_aligned_divisor(extent, align, cap):
    """Largest multiple of `align` that divides `extent`, capped at `cap`.
    Falls back to the full extent (always legal for a BlockSpec)."""
    t = (min(cap, extent) // align) * align
    while t >= align:
        if extent % t == 0:
            return t
        t -= align
    return extent


def combined_loss(logits, targets, *, smooth=1e-5,
                  dice_weight=0.5, bce_weight=0.5):
    """logits, targets: (B, C, H, W) arrays. Returns scalar f32 loss."""
    B, C, H, W = logits.shape
    R = B * C
    S = H * W
    logits2d = logits.reshape(R, S)
    targets2d = targets.reshape(R, S)

    # Row tile: sublane-aligned for the narrowest input dtype (8 for f32,
    # 16 for bf16, ...), capped at 64 rows; full extent as fallback.
    min_item = min(logits2d.dtype.itemsize, targets2d.dtype.itemsize)
    row_align = 8 * max(1, 4 // max(1, min_item))
    TR = _largest_aligned_divisor(R, row_align, 64)

    # Spatial tile: lane-dense (multiple of 128), <= 2048 lanes and bounded
    # so 2 inputs x 2 pipeline buffers stay far under the scoped VMEM limit.
    max_block_bytes = 4 << 20  # <= 4 MiB per input block
    max_ts = max(128, (max_block_bytes // (TR * 4)) // 128 * 128)
    TS = _largest_aligned_divisor(S, 128, min(2048, max_ts))

    n_rt = R // TR
    n_st = S // TS

    kernel = functools.partial(_combined_loss_kernel, smooth=float(smooth))

    partials = pl.pallas_call(
        kernel,
        out_shape=jax.ShapeDtypeStruct((n_rt, 2), jnp.float32),
        grid_spec=pltpu.PrefetchScalarGridSpec(
            num_scalar_prefetch=0,
            grid=(n_rt, n_st),
            in_specs=[
                pl.BlockSpec((TR, TS), lambda i, j: (i, j)),
                pl.BlockSpec((TR, TS), lambda i, j: (i, j)),
            ],
            out_specs=pl.BlockSpec((1, 2), lambda i, j: (i, 0),
                                   memory_space=pltpu.SMEM),
            scratch_shapes=[
                pltpu.VMEM((TR, 1), jnp.float32),  # intersection partials
                pltpu.VMEM((TR, 1), jnp.float32),  # union (probs + targets)
                pltpu.VMEM((TR, 1), jnp.float32),  # BCE partials
            ],
        ),
        compiler_params=pltpu.CompilerParams(
            dimension_semantics=("parallel", "arbitrary")),
    )(logits2d, targets2d)

    # Tiny final reduction in plain JAX (keeps the grid megacore-parallel).
    dice_loss = 1.0 - jnp.sum(partials[:, 0]) / float(R)
    bce_loss = jnp.sum(partials[:, 1]) / float(R * S)
    return dice_weight * dice_loss + bce_weight * bce_loss


def _reference_combined_loss(logits, targets, smooth=1e-5,
                             dice_weight=0.5, bce_weight=0.5):
    """Pure-JAX reference matching the PyTorch module semantics."""
    x = logits.astype(jnp.float32)
    t = targets.astype(jnp.float32)
    B, C = x.shape[0], x.shape[1]
    p = jax.nn.sigmoid(x).reshape(B, C, -1)
    tt = t.reshape(B, C, -1)
    inter = jnp.sum(p * tt, axis=2)
    union = jnp.sum(p, axis=2) + jnp.sum(tt, axis=2)
    dice = (2.0 * inter + smooth) / (union + smooth)
    dice_loss = 1.0 - jnp.mean(dice)
    bce = jnp.mean(jnp.maximum(x, 0.0) - x * t + jnp.log1p(jnp.exp(-jnp.abs(x))))
    return dice_weight * dice_loss + bce_weight * bce


if __name__ == "__main__":
    key = jax.random.PRNGKey(0)
    k1, k2 = jax.random.split(key)
    B, C, H, W = 2, 4, 16, 16
    logits = jax.random.normal(k1, (B, C, H, W), dtype=jnp.float32)
    targets = (jax.random.uniform(k2, (B, C, H, W)) > 0.5).astype(jnp.float32)

    loss = combined_loss(logits, targets)
    loss = jax.block_until_ready(loss)

    ref = _reference_combined_loss(logits, targets)
    assert jnp.allclose(loss, ref, rtol=1e-5, atol=1e-5), (loss, ref)
    print("KERNEL_OK")
</pallas_src>

<mosaic_0001>
module attributes {stable_mosaic.version = 11 : i64} {
  func.func @_combined_loss_kernel(%arg0: i32, %arg1: i32, %arg2: memref<8x256xf32, #tpu.memory_space<vmem>>, %arg3: memref<8x256xf32, #tpu.memory_space<vmem>>, %arg4: memref<1x2xf32, #tpu.memory_space<smem>>, %arg5: memref<8x1xf32, #tpu.memory_space<vmem>>, %arg6: memref<8x1xf32, #tpu.memory_space<vmem>>, %arg7: memref<8x1xf32, #tpu.memory_space<vmem>>) attributes {dimension_semantics = [#tpu.dimension_semantics<parallel>, #tpu.dimension_semantics<arbitrary>], iteration_bounds = array<i64: 1, 1>, scalar_prefetch = 0 : i64, scratch_operands = 3 : i64, tpu.core_type = #tpu.core_type<tc>, window_params = [{transform_indices = @transform_0, window_bounds = array<i64: 8, 256>}, {transform_indices = @transform_1, window_bounds = array<i64: 8, 256>}, {transform_indices = @transform_2, window_bounds = array<i64: 1, 2>}]} {
    %c0_i32 = arith.constant 0 : i32
    %0 = arith.cmpi eq, %arg1, %c0_i32 : i32
    %1 = arith.extui %0 : i1 to i32
    %c0_i32_0 = arith.constant 0 : i32
    %2 = arith.cmpi ne, %1, %c0_i32_0 : i32
    scf.if %2 {
      %cst_25 = arith.constant 0.000000e+00 : f32
      %43 = vector.broadcast %cst_25 : f32 to vector<8x1xf32>
      %c0_26 = arith.constant 0 : index
      %c0_27 = arith.constant 0 : index
      %44 = vector.load %arg5[%c0_26, %c0_27] : memref<8x1xf32, #tpu.memory_space<vmem>>, vector<8x1xf32>
      tpu.vector_store %arg5[%c0_26, %c0_27], %43 {strides = array<i32>} : memref<8x1xf32, #tpu.memory_space<vmem>>, vector<8x1xf32>,
      %cst_28 = arith.constant 0.000000e+00 : f32
      %45 = vector.broadcast %cst_28 : f32 to vector<8x1xf32>
      %c0_29 = arith.constant 0 : index
      %c0_30 = arith.constant 0 : index
      %46 = vector.load %arg6[%c0_29, %c0_30] : memref<8x1xf32, #tpu.memory_space<vmem>>, vector<8x1xf32>
      tpu.vector_store %arg6[%c0_29, %c0_30], %45 {strides = array<i32>} : memref<8x1xf32, #tpu.memory_space<vmem>>, vector<8x1xf32>,
      %cst_31 = arith.constant 0.000000e+00 : f32
      %47 = vector.broadcast %cst_31 : f32 to vector<8x1xf32>
      %c0_32 = arith.constant 0 : index
      %c0_33 = arith.constant 0 : index
      %48 = vector.load %arg7[%c0_32, %c0_33] : memref<8x1xf32, #tpu.memory_space<vmem>>, vector<8x1xf32>
      tpu.vector_store %arg7[%c0_32, %c0_33], %47 {strides = array<i32>} : memref<8x1xf32, #tpu.memory_space<vmem>>, vector<8x1xf32>,
    } else {
    }
    %c0 = arith.constant 0 : index
    %c0_1 = arith.constant 0 : index
    %3 = vector.load %arg2[%c0, %c0_1] : memref<8x256xf32, #tpu.memory_space<vmem>>, vector<8x256xf32>
    %c0_2 = arith.constant 0 : index
    %c0_3 = arith.constant 0 : index
    %4 = vector.load %arg3[%c0_2, %c0_3] : memref<8x256xf32, #tpu.memory_space<vmem>>, vector<8x256xf32>
    %5 = math.absf %3 : vector<8x256xf32>
    %cst = arith.constant 0.000000e+00 : f32
    %6 = vector.broadcast %cst : f32 to vector<8x256xf32>
    %7 = arith.subf %6, %5 : vector<8x256xf32>
    %8 = math.exp %7 : vector<8x256xf32>
    %cst_4 = arith.constant 1.000000e+00 : f32
    %9 = vector.broadcast %cst_4 : f32 to vector<8x256xf32>
    %10 = arith.addf %9, %8 : vector<8x256xf32>
    %cst_5 = arith.constant 1.000000e+00 : f32
    %11 = vector.broadcast %cst_5 : f32 to vector<8x256xf32>
    %12 = arith.divf %11, %10 : vector<8x256xf32>
    %cst_6 = arith.constant 0.000000e+00 : f32
    %13 = vector.broadcast %cst_6 : f32 to vector<8x256xf32>
    %14 = arith.cmpf oge, %3, %13 : vector<8x256xf32>
    %15 = arith.mulf %8, %12 : vector<8x256xf32>
    %16 = arith.select %14, %12, %15 : vector<8x256xi1>, vector<8x256xf32>
    %c0_7 = arith.constant 0 : index
    %c0_8 = arith.constant 0 : index
    %17 = vector.load %arg5[%c0_7, %c0_8] : memref<8x1xf32, #tpu.memory_space<vmem>>, vector<8x1xf32>
    %18 = arith.mulf %16, %4 : vector<8x256xf32>
    %cst_9 = arith.constant dense<0.000000e+00> : vector<8xf32>
    %19 = vector.multi_reduction <add>, %18, %cst_9 [1] : vector<8x256xf32> to vector<8xf32>
    %20 = vector.shape_cast %19 : vector<8xf32> to vector<8x1xf32>
    %21 = arith.addf %17, %20 : vector<8x1xf32>
    %c0_10 = arith.constant 0 : index
    %c0_11 = arith.constant 0 : index
    %22 = vector.load %arg5[%c0_10, %c0_11] : memref<8x1xf32, #tpu.memory_space<vmem>>, vector<8x1xf32>
    tpu.vector_store %arg5[%c0_10, %c0_11], %21 {strides = array<i32>} : memref<8x1xf32, #tpu.memory_space<vmem>>, vector<8x1xf32>,
    %c0_12 = arith.constant 0 : index
    %c0_13 = arith.constant 0 : index
    %23 = vector.load %arg6[%c0_12, %c0_13] : memref<8x1xf32, #tpu.memory_space<vmem>>, vector<8x1xf32>
    %24 = arith.addf %16, %4 : vector<8x256xf32>
    %cst_14 = arith.constant dense<0.000000e+00> : vector<8xf32>
    %25 = vector.multi_reduction <add>, %24, %cst_14 [1] : vector<8x256xf32> to vector<8xf32>
    %26 = vector.shape_cast %25 : vector<8xf32> to vector<8x1xf32>
    %27 = arith.addf %23, %26 : vector<8x1xf32>
    %c0_15 = arith.constant 0 : index
    %c0_16 = arith.constant 0 : index
    %28 = vector.load %arg6[%c0_15, %c0_16] : memref<8x1xf32, #tpu.memory_space<vmem>>, vector<8x1xf32>
    tpu.vector_store %arg6[%c0_15, %c0_16], %27 {strides = array<i32>} : memref<8x1xf32, #tpu.memory_space<vmem>>, vector<8x1xf32>,
    %cst_17 = arith.constant 0.000000e+00 : f32
    %29 = vector.broadcast %cst_17 : f32 to vector<8x256xf32>
    %30 = arith.maximumf %3, %29 : vector<8x256xf32>
    %31 = arith.mulf %3, %4 : vector<8x256xf32>
    %32 = arith.subf %30, %31 : vector<8x256xf32>
    %33 = math.log1p %8 : vector<8x256xf32>
    %34 = arith.addf %32, %33 : vector<8x256xf32>
    %c0_18 = arith.constant 0 : index
    %c0_19 = arith.constant 0 : index
    %35 = vector.load %arg7[%c0_18, %c0_19] : memref<8x1xf32, #tpu.memory_space<vmem>>, vector<8x1xf32>
    %cst_20 = arith.constant dense<0.000000e+00> : vector<8xf32>
    %36 = vector.multi_reduction <add>, %34, %cst_20 [1] : vector<8x256xf32> to vector<8xf32>
    %37 = vector.shape_cast %36 : vector<8xf32> to vector<8x1xf32>
    %38 = arith.addf %35, %37 : vector<8x1xf32>
    %c0_21 = arith.constant 0 : index
    %c0_22 = arith.constant 0 : index
    %39 = vector.load %arg7[%c0_21, %c0_22] : memref<8x1xf32, #tpu.memory_space<vmem>>, vector<8x1xf32>
    tpu.vector_store %arg7[%c0_21, %c0_22], %38 {strides = array<i32>} : memref<8x1xf32, #tpu.memory_space<vmem>>, vector<8x1xf32>,
    %c0_i32_23 = arith.constant 0 : i32
    %40 = arith.cmpi eq, %arg1, %c0_i32_23 : i32
    %41 = arith.extui %40 : i1 to i32
    %c0_i32_24 = arith.constant 0 : i32
    %42 = arith.cmpi ne, %41, %c0_i32_24 : i32
    scf.if %42 {
      %c0_25 = arith.constant 0 : index
      %c0_26 = arith.constant 0 : index
      %43 = vector.load %arg5[%c0_25, %c0_26] : memref<8x1xf32, #tpu.memory_space<vmem>>, vector<8x1xf32>
      %cst_27 = arith.constant 2.000000e+00 : f32
      %44 = vector.broadcast %cst_27 : f32 to vector<8x1xf32>
      %45 = arith.mulf %44, %43 : vector<8x1xf32>
      %cst_28 = arith.constant 9.99999974E-6 : f32
      %46 = vector.broadcast %cst_28 : f32 to vector<8x1xf32>
      %47 = arith.addf %45, %46 : vector<8x1xf32>
      %c0_29 = arith.constant 0 : index
      %c0_30 = arith.constant 0 : index
      %48 = vector.load %arg6[%c0_29, %c0_30] : memref<8x1xf32, #tpu.memory_space<vmem>>, vector<8x1xf32>
      %cst_31 = arith.constant 9.99999974E-6 : f32
      %49 = vector.broadcast %cst_31 : f32 to vector<8x1xf32>
      %50 = arith.addf %48, %49 : vector<8x1xf32>
      %51 = arith.divf %47, %50 : vector<8x1xf32>
      %52 = vector.shape_cast %51 : vector<8x1xf32> to vector<1x8x1xf32>
      %cst_32 = arith.constant dense<0.000000e+00> : vector<1xf32>
      %53 = vector.multi_reduction <add>, %52, %cst_32 [1, 2] : vector<1x8x1xf32> to vector<1xf32>
      %54 = vector.shape_cast %53 : vector<1xf32> to vector<1x1x1xf32>
      %55 = vector.extract %54[0, 0, 0] : f32 from vector<1x1x1xf32>
      %c0_33 = arith.constant 0 : index
      %c0_34 = arith.constant 0 : index
      %56 = memref.load %arg4[%c0_33, %c0_34] : memref<1x2xf32, #tpu.memory_space<smem>>
      memref.store %55, %arg4[%c0_33, %c0_34] : memref<1x2xf32, #tpu.memory_space<smem>>
      %c0_35 = arith.constant 0 : index
      %c0_36 = arith.constant 0 : index
      %57 = vector.load %arg7[%c0_35, %c0_36] : memref<8x1xf32, #tpu.memory_space<vmem>>, vector<8x1xf32>
      %58 = vector.shape_cast %57 : vector<8x1xf32> to vector<1x8x1xf32>
      %cst_37 = arith.constant dense<0.000000e+00> : vector<1xf32>
      %59 = vector.multi_reduction <add>, %58, %cst_37 [1, 2] : vector<1x8x1xf32> to vector<1xf32>
      %60 = vector.shape_cast %59 : vector<1xf32> to vector<1x1x1xf32>
      %61 = vector.extract %60[0, 0, 0] : f32 from vector<1x1x1xf32>
      %c0_38 = arith.constant 0 : index
      %c1 = arith.constant 1 : index
      %62 = memref.load %arg4[%c0_38, %c1] : memref<1x2xf32, #tpu.memory_space<smem>>
      memref.store %61, %arg4[%c0_38, %c1] : memref<1x2xf32, #tpu.memory_space<smem>>
    } else {
    }
    return
  }
  func.func @transform_0(%arg0: i32, %arg1: i32) -> (i32, i32) {
    %c0_i32 = arith.constant 0 : i32
    return %arg0, %arg1 : i32, i32
  }
  func.func @transform_1(%arg0: i32, %arg1: i32) -> (i32, i32) {
    %c0_i32 = arith.constant 0 : i32
    return %arg0, %arg1 : i32, i32
  }
  func.func @transform_2(%arg0: i32, %arg1: i32) -> (i32, i32) {
    %c0_i32 = arith.constant 0 : i32
    %c0_i32_0 = arith.constant 0 : i32
    return %arg0, %c0_i32 : i32, i32
  }
}

</mosaic_0001>

<llo_original>
// kernel: tpu_custom_call.1
$region0: #{tpu_custom_call.1}
  #allocation0 [shape = 'u32[]', space=smem, size = 0x4, offset = 0x4, fixed_abs, tag = 'smem constant byte address 0x4 - core index']
  #allocation1 [shape = 'u32[144,128]{1,0:T(1,128)}', space=vmem, size = 0x12000, scoped, tag = 'internal scratch']
  #allocation2 [shape = 'f32[8,1]{1,0:T(8,128)}', space=vmem, size = 0x1000, scoped, tag = 'scratch operand']
  #allocation3 [shape = 'f32[8,1]{1,0:T(8,128)}', space=vmem, size = 0x1000, scoped, tag = 'scratch operand']
  #allocation4 [shape = 'f32[8,1]{1,0:T(8,128)}', space=vmem, size = 0x1000, scoped, tag = 'scratch operand']
  %s0 = inlined_call_operand.hbm [shape: f32[8,256], index: 0, kind: input, shape index: {}]
  %s1 = inlined_call_operand.hbm [shape: f32[8,256], index: 1, kind: input, shape index: {}]
  %s2 = inlined_call_operand.hbm [shape: f32[1,2], index: 2, kind: output, shape index: {}]
  %s3 = sld [smem:[#allocation0]]
  $region34: #{tpu_custom_call.1} parent=0
    _
  %s5 = ssub.s32 1, %s3
  %s6 = scalar_select 0, %s5, %s3
  $region1: #{tpu_custom_call.1} parent=0
    #allocation5 [shape = 'u8[8192]{0}', space=vmem, size = 0x2000, scoped, tag = 'input window, operand 0, single buffered']
    #allocation6 [shape = 's32[1]{0}', space=sflag, size = 0x4, scoped, tag = 'scoped memory for tpu_custom_call.1']
    #allocation7 [shape = 's32[1]{0}', space=sflag, size = 0x4, scoped, tag = 'scoped memory for tpu_custom_call.1']
    #allocation8 [shape = 'u8[8192]{0}', space=vmem, size = 0x2000, scoped, tag = 'input window, operand 1, single buffered']
    #allocation9 [shape = 's32[1]{0}', space=sflag, size = 0x4, scoped, tag = 'scoped memory for tpu_custom_call.1']
    #allocation10 [shape = 'u8[512]{0}', space=smem, size = 0x200, scoped, tag = 'output window, operand 0, single buffered']
    %7 = vsyncpa [#allocation6], 0
    %8 = vsyncpa [#allocation9], 0
    %9 = vsyncpa [#allocation7], 0
    // Predicated region
    $region2: #{tpu_custom_call.1} parent=1 // pred_check
      _
    $region3: #{tpu_custom_call.1} parent=1 // pred_check_branch
      %11 = sbr.rel (0) target = $region5
    $region4: #{tpu_custom_call.1} parent=1 // pred_region
      %s13 = ssub.s32 256, 256
      %14 = vsyncadd [#allocation6], %s13
      %s16 = sshll.u32 [#allocation5], 4
      %s17 = int_to_ptr.vmem [resolvable:$true] %s16
      %19 = dma.hbm_to_vmem [thread:$0]  %s0, 256, %s17, [#allocation6]
    $region5: #{tpu_custom_call.1} parent=1 // pred_fallthru
      _
    // Predicated region
    $region6: #{tpu_custom_call.1} parent=1 // pred_check
      _
    $region7: #{tpu_custom_call.1} parent=1 // pred_check_branch
      %21 = sbr.rel (0) target = $region9
    $region8: #{tpu_custom_call.1} parent=1 // pred_region
      %s23 = ssub.s32 256, 256
      %24 = vsyncadd [#allocation9], %s23
      %s26 = sshll.u32 [#allocation8], 4
      %s27 = int_to_ptr.vmem [resolvable:$true] %s26
      %29 = dma.hbm_to_vmem [thread:$0]  %s1, 256, %s27, [#allocation9]
    $region9: #{tpu_custom_call.1} parent=1 // pred_fallthru
      _
    // Predicated region
    $region10: #{tpu_custom_call.1} parent=1 // pred_check
      _
    $region11: #{tpu_custom_call.1} parent=1 // pred_check_branch
      %31 = sbr.rel (0) target = $region13
    $region12: #{tpu_custom_call.1} parent=1 // pred_region
      %32 = dma.done [#allocation6], 256
    $region13: #{tpu_custom_call.1} parent=1 // pred_fallthru
      _
    // Predicated region
    $region14: #{tpu_custom_call.1} parent=1 // pred_check
      _
    $region15: #{tpu_custom_call.1} parent=1 // pred_check_branch
      %34 = sbr.rel (0) target = $region17
    $region16: #{tpu_custom_call.1} parent=1 // pred_region
      %35 = dma.done [#allocation9], 256
    $region17: #{tpu_custom_call.1} parent=1 // pred_fallthru
      _
    %p36 = scmp.eq.s32.totalorder 0, 0
    // Predicated region
    $region18: #{tpu_custom_call.1} parent=1 // pred_check
      %p37 = pneg %p36
    $region19: #{tpu_custom_call.1} parent=1 // pred_check_branch
      %39 = sbr.rel (%p37) target = $region21
    $region20: #{tpu_custom_call.1} parent=1 // pred_region
      %vm40 = vcmask 7168
      %41 = vst.msk [vmem:[#allocation2] sm:$0xff] %vm40, 0.0
      %42 = vst.msk [vmem:[#allocation3] sm:$0xff] %vm40, 0.0
      %43 = vst.msk [vmem:[#allocation4] sm:$0xff] %vm40, 0.0
    $region21: #{tpu_custom_call.1} parent=1 // pred_fallthru
      _
    %v44 = vld [vmem:[#allocation5] sm:$0xff]
    %v45 = vld [vmem:[#allocation5 + $0x8] sm:$0xff]
    %v46 = vld [vmem:[#allocation8] sm:$0xff]
    %v47 = vld [vmem:[#allocation8 + $0x8] sm:$0xff]
    %v48 = vand.u32 2147483647, %v44
    %v49 = vand.u32 2147483647, %v45
    %v50 = vsub.f32 0.0, %v48
    %v51 = vsub.f32 0.0, %v49
    %v52 = vmul.f32 %v50, 1.442695
    %v53 = vpow.pop %v52
    %v54 = vmul.f32 %v51, 1.442695
    %v55 = vpow.pop %v54
    %v56 = vadd.f32 %v53, 1.0
    %v57 = vadd.f32 %v55, 1.0
    %v58 = vrcp.pop %v56
    %v59 = vmul.f32 1.0, %v58
    %v60 = vrcp.pop %v57
    %v61 = vmul.f32 1.0, %v60
    %vm62 = vcmp.ge.f32.partialorder %v44, 0.0
    %vm63 = vcmp.ge.f32.partialorder %v45, 0.0
    %v64 = vmul.f32 %v53, %v59
    %v65 = vmul.f32 %v55, %v61
    %v66 = vsel %vm62, %v59, %v64
    %v67 = vsel %vm63, %v61, %v65
    %v68 = vld [vmem:[#allocation2] sm:$0xff]
    %v69 = vmul.f32 %v66, %v46
    %v70 = vmul.f32 %v67, %v47
    %v71 = vadd.f32 %v69, %v70
    %72 = vadd.xlane.f32.xlu0 %v71
    %v73 = vpop.xlane.xlu0 %72
    %v74 = vadd.f32 %v68, %v73
    %vm75 = vcmask 7168
    %76 = vst.msk [vmem:[#allocation2] sm:$0xff] %vm75, %v74
    %v77 = vld [vmem:[#allocation3] sm:$0xff]
    %v78 = vadd.f32 %v66, %v46
    %v79 = vadd.f32 %v67, %v47
    %v80 = vadd.f32 %v78, %v79
    %81 = vadd.xlane.f32.xlu0 %v80
    %v82 = vpop.xlane.xlu0 %81
    %v83 = vadd.f32 %v77, %v82
    %84 = vst.msk [vmem:[#allocation3] sm:$0xff] %vm75, %v83
    %v85 = vmax.f32 %v44, 0.0
    %v86 = vmax.f32 %v45, 0.0
    %v87 = vmul.f32 %v44, %v46
    %v88 = vmul.f32 %v45, %v47
    %v89 = vsub.f32 %v85, %v87
    %v90 = vsub.f32 %v86, %v88
    %v91 = vadd.f32 %v53, 1.0
    %v92 = vlog2.pop %v91
    %v93 = vmul.f32 %v92, 0.6931472
    %v94 = vmul.f32 -0.5, %v53
    %v95 = vadd.f32 %v94, 1.0
    %v96 = vmul.f32 %v95, %v53
    %v97 = vand.u32 2147483647, %v53
    %vm98 = vcmp.lt.f32.partialorder %v97, 0.0004427343
    %v99 = vsel %vm98, %v96, %v93
    %v100 = vadd.f32 %v55, 1.0
    %v101 = vlog2.pop %v100
    %v102 = vmul.f32 %v101, 0.6931472
    %v103 = vmul.f32 -0.5, %v55
    %v104 = vadd.f32 %v103, 1.0
    %v105 = vmul.f32 %v104, %v55
    %v106 = vand.u32 2147483647, %v55
    %vm107 = vcmp.lt.f32.partialorder %v106, 0.0004427343
    %v108 = vsel %vm107, %v105, %v102
    %v109 = vadd.f32 %v89, %v99
    %v110 = vadd.f32 %v90, %v108
    %v111 = vld [vmem:[#allocation4] sm:$0xff]
    %v112 = vadd.f32 %v109, %v110
    %113 = vadd.xlane.f32.xlu0 %v112
    %v114 = vpop.xlane.xlu0 %113
    %v115 = vadd.f32 %v111, %v114
    %116 = vst.msk [vmem:[#allocation4] sm:$0xff] %vm75, %v115
    // Predicated region
    $region22: #{tpu_custom_call.1} parent=1 // pred_check
      %p117 = pneg %p36
    $region23: #{tpu_custom_call.1} parent=1 // pred_check_branch
      %119 = sbr.rel (%p117) target = $region25
    $region24: #{tpu_custom_call.1} parent=1 // pred_region
      %v120 = vld [vmem:[#allocation2] sm:$0xff]
      %v121 = vmul.f32 %v120, 2.0
      %v122 = vadd.f32 %v121, 1e-05
      %v123 = vld [vmem:[#allocation3] sm:$0xff]
      %v124 = vadd.f32 %v123, 1e-05
      %v125 = vrcp.pop %v124
      %v126 = vmul.f32 %v122, %v125
      %v127 = vsel %vm75, %v126, 0.0
      %128 = vadd.xlane.f32.xlu0 %v127
      %v129 = vpop.xlane.xlu0 %128
      %v130 = vrot.slane %v129, 4
      %v131 = vadd.f32 %v129, %v130
      %v132 = vrot.slane %v131, 2
      %v133 = vadd.f32 %v131, %v132
      %v134 = vrot.slane %v133, 1
      %v135 = vadd.f32 %v133, %v134
      %s136 = vtos %v135
      %s137 = scalar_lea.smem [#allocation10], 0
      %138 = sst [smem:[%s137]] %s136
      %v139 = vld [vmem:[#allocation4] sm:$0xff]
      %v140 = vsel %vm75, %v139, 0.0
      %141 = vadd.xlane.f32.xlu0 %v140
      %v142 = vpop.xlane.xlu0 %141
      %v143 = vrot.slane %v142, 4
      %v144 = vadd.f32 %v142, %v143
      %v145 = vrot.slane %v144, 2
      %v146 = vadd.f32 %v144, %v145
      %v147 = vrot.slane %v146, 1
      %v148 = vadd.f32 %v146, %v147
      %s149 = vtos %v148
      %s150 = scalar_lea.smem [#allocation10], 1
      %151 = sst [smem:[%s150]] %s149
    $region25: #{tpu_custom_call.1} parent=1 // pred_fallthru
      _
    // Predicated region
    $region26: #{tpu_custom_call.1} parent=1 // pred_check
      _
    $region27: #{tpu_custom_call.1} parent=1 // pred_check_branch
      %153 = sbr.rel (0) target = $region29
    $region28: #{tpu_custom_call.1} parent=1 // pred_region
      %s155 = ssub.s32 16, 16
      %156 = vsyncadd [#allocation7], %s155
      %159 = dma.smem_to_hbm [#allocation10], 16, %s2, [#allocation7]
    $region29: #{tpu_custom_call.1} parent=1 // pred_fallthru
      _
    // Predicated region
    $region30: #{tpu_custom_call.1} parent=1 // pred_check
      _
    $region31: #{tpu_custom_call.1} parent=1 // pred_check_branch
      %161 = sbr.rel (0) target = $region33
    $region32: #{tpu_custom_call.1} parent=1 // pred_region
      %162 = dma.done [#allocation7], 16
    $region33: #{tpu_custom_call.1} parent=1 // pred_fallthru
      _
    %163 = sfence
    %164 = vsyncpa [#allocation6], 1
    %165 = vsyncpa [#allocation9], 1
    %166 = vsyncpa [#allocation7], 1

</llo_original>
